<compile_context>
chip_gen: v6e
topology: v6e:2x2x1
jax: 0.10.0
libtpu: 0.0.40
codegen_flags: <defaults>
</compile_context>

<pallas_src>
import functools

import jax
import jax.numpy as jnp
from jax import lax
from jax.experimental import pallas as pl
from jax.experimental.pallas import tpu as pltpu


def _ce_label_smooth_kernel(logits_ref, targets_ref, out_ref, *,
                            epsilon, num_classes, batch, tile_b, has_padding):
    """Per-sample label-smoothed cross entropy for one batch tile.

    logits_ref : (TB, K) native-dtype VMEM tile
    targets_ref: (TB, 1) int32 VMEM tile
    out_ref    : (TB, 1) float32 VMEM tile (per-sample loss; 0 for padded rows)
    """
    x_nat = logits_ref[...]                                       # (TB, K) native
    tb, k = x_nat.shape

    row_ids = (pl.program_id(0) * tile_b
               + lax.broadcasted_iota(jnp.int32, (tb, 1), 0))     # (TB, 1)
    valid = row_ids < batch                                       # (TB, 1) bool

    if has_padding:
        # Zero padded rows on the native tile so exp/log never see the
        # unspecified HBM data of the last partial tile.
        x_nat = jnp.where(valid, x_nat, jnp.zeros_like(x_nat))

    # Row max + target gather on the NATIVE tile (both exact; packed bf16
    # vregs run 2x elements/op on v6e/v7x and halve f32 temporaries).
    m_nat = jnp.max(x_nat, axis=-1, keepdims=True)                # (TB, 1)
    col_ids = lax.broadcasted_iota(jnp.int32, (tb, k), 1)         # (TB, K)
    tgt_nat = jnp.sum(
        jnp.where(col_ids == targets_ref[...], x_nat, jnp.zeros_like(x_nat)),
        axis=-1, keepdims=True)                                   # (TB, 1) exact (one nonzero)

    # f32 only for the subtract / exp / sum / log path.
    m = m_nat.astype(jnp.float32)                                 # (TB, 1)
    shifted = x_nat.astype(jnp.float32) - m                       # (TB, K) f32
    lse = jnp.log(jnp.sum(jnp.exp(shifted), axis=-1, keepdims=True))  # (TB, 1)
    row_sum = jnp.sum(shifted, axis=-1, keepdims=True)            # (TB, 1)
    tgt_shifted = tgt_nat.astype(jnp.float32) - m                 # (TB, 1)

    # loss_i = lse_i - (1-eps)*shifted[i,t_i] - (eps/K)*sum_j shifted[i,j]
    per_row = (lse
               - (1.0 - epsilon) * tgt_shifted
               - (epsilon / num_classes) * row_sum)               # (TB, 1)

    out_ref[...] = jnp.where(valid, per_row, 0.0)


def _choose_tile_b(batch, num_classes, itemsize):
    """Batch-tile rows, sized by BYTES of the native-dtype logits tile.

    ~4 MiB/tile: large enough to reach the HBM roofline and amortize per-step
    overhead on v5e/v6e, small enough that double-buffered inputs plus the
    ~3 f32-sized temporaries stay <= ~32 MiB (inside the 48 MiB scoped limit
    and v7x's 64 MiB physical VMEM per TensorCore).  Never returns a
    single-tile grid when batch > 8 so the "parallel" grid axis can be
    sharded across v7x's two TensorCores.
    """
    budget_bytes = 4 * 1024 * 1024
    row_bytes = max(1, num_classes * itemsize)
    tb_budget = max(8, (budget_bytes // row_bytes) // 8 * 8)
    # Largest tile that still yields >= 2 grid steps (rounded up to 8 sublanes).
    tb_two_tiles = max(8, (((batch + 1) // 2) + 7) // 8 * 8)
    return min(tb_budget, tb_two_tiles)


def _xla_forward(logits, targets, *, epsilon, reduction):
    """Plain-XLA path (used for K < 128, where lane utilization is < 100%
    and a Pallas kernel buys nothing)."""
    num_classes = logits.shape[1]
    log_probs = jax.nn.log_softmax(logits.astype(jnp.float32), axis=1)
    onehot = jax.nn.one_hot(targets, num_classes, dtype=jnp.float32)
    smoothed = (1.0 - epsilon) * onehot + epsilon / num_classes
    loss = jnp.sum(-smoothed * log_probs, axis=1)
    return jnp.mean(loss) if reduction else loss


def cross_entropy_label_smooth(logits, targets, *, epsilon=0.1, reduction=True,
                               min_pallas_classes=128):
    """Pallas equivalent of CrossEntropyLabelSmooth(num_classes).forward.

    logits : (batch, num_classes) float array (pre-softmax); native dtype is
             kept on the HBM->VMEM wire (prefer feeding bf16 on v5e).
    targets: (batch,) integer class labels in [0, num_classes).
    returns: scalar float32 mean loss (reduction=True) or (batch,) losses.
    """
    batch, num_classes = logits.shape

    if num_classes < min_pallas_classes:
        return _xla_forward(logits, targets, epsilon=epsilon, reduction=reduction)

    itemsize = jnp.dtype(logits.dtype).itemsize
    tb = _choose_tile_b(batch, num_classes, itemsize)
    num_tiles = pl.cdiv(batch, tb)
    padded_batch = num_tiles * tb

    targets_col = targets.astype(jnp.int32).reshape(batch, 1)

    kernel = functools.partial(
        _ce_label_smooth_kernel,
        epsilon=float(epsilon),
        num_classes=int(num_classes),
        batch=int(batch),
        tile_b=int(tb),
        has_padding=bool(padded_batch != batch),
    )

    per_row = pl.pallas_call(
        kernel,
        out_shape=jax.ShapeDtypeStruct((padded_batch, 1), jnp.float32),
        grid=(num_tiles,),
        in_specs=[
            pl.BlockSpec((tb, num_classes), lambda i: (i, 0)),
            pl.BlockSpec((tb, 1), lambda i: (i, 0)),
        ],
        out_specs=pl.BlockSpec((tb, 1), lambda i: (i, 0)),
        compiler_params=pltpu.CompilerParams(
            dimension_semantics=("parallel",),
            vmem_limit_bytes=48 * 1024 * 1024,
        ),
    )(logits, targets_col)

    if reduction:
        # Padded rows contribute exactly 0; divide by the TRUE batch.
        return jnp.sum(per_row) / batch
    return per_row[:batch, 0]


def _reference(logits, targets, epsilon=0.1, reduction=True):
    """Pure-JAX reference mirroring the PyTorch module."""
    return _xla_forward(logits, targets, epsilon=epsilon, reduction=reduction)


if __name__ == "__main__":
    key = jax.random.PRNGKey(0)
    k_logits, k_targets, k_logits2, k_targets2 = jax.random.split(key, 4)

    # --- main Pallas path: K >= 128, batch split into >= 2 tiles ---
    batch, num_classes = 32, 512
    logits_f32 = jax.random.normal(k_logits, (batch, num_classes), dtype=jnp.float32)
    targets = jax.random.randint(k_targets, (batch,), 0, num_classes, dtype=jnp.int32)

    loss = jax.block_until_ready(
        cross_entropy_label_smooth(logits_f32, targets, epsilon=0.1))
    ref = _reference(logits_f32, targets, epsilon=0.1)
    assert jnp.allclose(loss, ref, atol=1e-5, rtol=1e-5), (loss, ref)

    # per-sample (reduction=False) path
    per = jax.block_until_ready(
        cross_entropy_label_smooth(logits_f32, targets, epsilon=0.1, reduction=False))
    per_ref = _reference(logits_f32, targets, epsilon=0.1, reduction=False)
    assert jnp.allclose(per, per_ref, atol=1e-5, rtol=1e-5)

    # bfloat16 path (native dtype on the wire; exact max/gather, f32 exp/log)
    logits_bf16 = logits_f32.astype(jnp.bfloat16)
    loss_bf16 = jax.block_until_ready(
        cross_entropy_label_smooth(logits_bf16, targets, epsilon=0.1))
    ref_bf16 = _reference(logits_bf16, targets, epsilon=0.1)
    assert jnp.allclose(loss_bf16, ref_bf16, atol=1e-3, rtol=1e-3), (loss_bf16, ref_bf16)

    # ragged batch -> last tile padded; padded rows masked before exp/log
    batch2 = 37
    logits2 = jax.random.normal(k_logits2, (batch2, num_classes), dtype=jnp.float32)
    targets2 = jax.random.randint(k_targets2, (batch2,), 0, num_classes, dtype=jnp.int32)
    loss2 = jax.block_until_ready(
        cross_entropy_label_smooth(logits2, targets2, epsilon=0.1))
    ref2 = _reference(logits2, targets2, epsilon=0.1)
    assert jnp.allclose(loss2, ref2, atol=1e-5, rtol=1e-5), (loss2, ref2)

    # small-K (<128 lanes) falls back to plain XLA
    small_logits = logits_f32[:8, :32]
    small_targets = jnp.clip(targets[:8], 0, 31)
    loss_small = jax.block_until_ready(
        cross_entropy_label_smooth(small_logits, small_targets, epsilon=0.1))
    ref_small = _reference(small_logits, small_targets, epsilon=0.1)
    assert jnp.allclose(loss_small, ref_small, atol=1e-5, rtol=1e-5)

    print("KERNEL_OK")
</pallas_src>

<mosaic_0001>
module attributes {stable_mosaic.version = 11 : i64} {
  func.func @_ce_label_smooth_kernel(%arg0: i32, %arg1: memref<16x512xf32, #tpu.memory_space<vmem>>, %arg2: memref<16x1xi32, #tpu.memory_space<vmem>>, %arg3: memref<16x1xf32, #tpu.memory_space<vmem>>) attributes {dimension_semantics = [#tpu.dimension_semantics<parallel>], iteration_bounds = array<i64: 2>, scalar_prefetch = 0 : i64, scratch_operands = 0 : i64, tpu.core_type = #tpu.core_type<tc>, window_params = [{transform_indices = @transform_0, window_bounds = array<i64: 16, 512>}, {transform_indices = @transform_1, window_bounds = array<i64: 16, 1>}, {transform_indices = @transform_2, window_bounds = array<i64: 16, 1>}]} {
    %c0 = arith.constant 0 : index
    %c0_0 = arith.constant 0 : index
    %0 = vector.load %arg1[%c0, %c0_0] : memref<16x512xf32, #tpu.memory_space<vmem>>, vector<16x512xf32>
    %c16_i32 = arith.constant 16 : i32
    %1 = arith.muli %arg0, %c16_i32 : i32
    %2 = tpu.iota {dimensions = array<i32: 0>} : vector<16x1xi32>
    %3 = vector.broadcast %1 : i32 to vector<16x1xi32>
    %4 = arith.addi %3, %2 : vector<16x1xi32>
    %c32_i32 = arith.constant 32 : i32
    %5 = vector.broadcast %c32_i32 : i32 to vector<16x1xi32>
    %6 = arith.cmpi slt, %4, %5 : vector<16x1xi32>
    %cst = arith.constant dense<0xFF800000> : vector<16xf32>
    %7 = vector.multi_reduction <maximumf>, %0, %cst [1] : vector<16x512xf32> to vector<16xf32>
    %8 = vector.shape_cast %7 : vector<16xf32> to vector<16x1xf32>
    %9 = tpu.iota {dimensions = array<i32: 1>} : vector<16x512xi32>
    %c0_1 = arith.constant 0 : index
    %c0_2 = arith.constant 0 : index
    %10 = vector.load %arg2[%c0_1, %c0_2] : memref<16x1xi32, #tpu.memory_space<vmem>>, vector<16x1xi32>
    %11 = vector.broadcast %10 : vector<16x1xi32> to vector<16x512xi32>
    %12 = arith.cmpi eq, %9, %11 : vector<16x512xi32>
    %cst_3 = arith.constant 0.000000e+00 : f32
    %13 = vector.broadcast %cst_3 : f32 to vector<16x512xf32>
    %14 = arith.select %12, %0, %13 : vector<16x512xi1>, vector<16x512xf32>
    %cst_4 = arith.constant dense<0.000000e+00> : vector<16xf32>
    %15 = vector.multi_reduction <add>, %14, %cst_4 [1] : vector<16x512xf32> to vector<16xf32>
    %16 = vector.shape_cast %15 : vector<16xf32> to vector<16x1xf32>
    %17 = vector.broadcast %8 : vector<16x1xf32> to vector<16x512xf32>
    %18 = arith.subf %0, %17 : vector<16x512xf32>
    %19 = math.exp %18 : vector<16x512xf32>
    %cst_5 = arith.constant dense<0.000000e+00> : vector<16xf32>
    %20 = vector.multi_reduction <add>, %19, %cst_5 [1] : vector<16x512xf32> to vector<16xf32>
    %21 = vector.shape_cast %20 : vector<16xf32> to vector<16x1xf32>
    %22 = math.log %21 : vector<16x1xf32>
    %cst_6 = arith.constant dense<0.000000e+00> : vector<16xf32>
    %23 = vector.multi_reduction <add>, %18, %cst_6 [1] : vector<16x512xf32> to vector<16xf32>
    %24 = vector.shape_cast %23 : vector<16xf32> to vector<16x1xf32>
    %25 = arith.subf %16, %8 : vector<16x1xf32>
    %cst_7 = arith.constant 0.899999976 : f32
    %26 = vector.broadcast %cst_7 : f32 to vector<16x1xf32>
    %27 = arith.mulf %26, %25 : vector<16x1xf32>
    %28 = arith.subf %22, %27 : vector<16x1xf32>
    %cst_8 = arith.constant 1.95312503E-4 : f32
    %29 = vector.broadcast %cst_8 : f32 to vector<16x1xf32>
    %30 = arith.mulf %29, %24 : vector<16x1xf32>
    %31 = arith.subf %28, %30 : vector<16x1xf32>
    %cst_9 = arith.constant 0.000000e+00 : f32
    %32 = vector.broadcast %cst_9 : f32 to vector<16x1xf32>
    %33 = arith.select %6, %31, %32 : vector<16x1xi1>, vector<16x1xf32>
    %c0_10 = arith.constant 0 : index
    %c0_11 = arith.constant 0 : index
    %34 = vector.load %arg3[%c0_10, %c0_11] : memref<16x1xf32, #tpu.memory_space<vmem>>, vector<16x1xf32>
    tpu.vector_store %arg3[%c0_10, %c0_11], %33 {strides = array<i32>} : memref<16x1xf32, #tpu.memory_space<vmem>>, vector<16x1xf32>,
    return
  }
  func.func @transform_0(%arg0: i32) -> (i32, i32) {
    %c0_i32 = arith.constant 0 : i32
    %c0_i32_0 = arith.constant 0 : i32
    return %arg0, %c0_i32 : i32, i32
  }
  func.func @transform_1(%arg0: i32) -> (i32, i32) {
    %c0_i32 = arith.constant 0 : i32
    %c0_i32_0 = arith.constant 0 : i32
    return %arg0, %c0_i32 : i32, i32
  }
  func.func @transform_2(%arg0: i32) -> (i32, i32) {
    %c0_i32 = arith.constant 0 : i32
    %c0_i32_0 = arith.constant 0 : i32
    return %arg0, %c0_i32 : i32, i32
  }
}

</mosaic_0001>

<llo_original>
// kernel: tpu_custom_call.1
$region0: #{tpu_custom_call.1}
  #allocation0 [shape = 'u32[]', space=smem, size = 0x4, offset = 0x4, fixed_abs, tag = 'smem constant byte address 0x4 - core index']
  #allocation1 [shape = 'u32[144,128]{1,0:T(1,128)}', space=vmem, size = 0x12000, scoped, tag = 'internal scratch']
  %s0 = inlined_call_operand.hbm [shape: f32[32,512], index: 0, kind: input, shape index: {}]
  %s1 = inlined_call_operand.vmem [shape: s32[32,1], index: 1, kind: input, shape index: {}]
  %s2 = inlined_call_operand.vmem [shape: f32[32,1], index: 2, kind: output, shape index: {}]
  %s3 = sld [smem:[#allocation0]]
  $region45: #{tpu_custom_call.1} parent=0
    _
  %s5 = ssub.s32 1, %s3
  %s6 = scalar_select 0, %s5, %s3
  $region1: #{tpu_custom_call.1} parent=0
    #allocation2 [shape = 'u8[65536]{0}', space=vmem, size = 0x10000, scoped, tag = 'input window, operand 0']
    #allocation3 [shape = 's32[2]{0}', space=sflag, size = 0x8, scoped, tag = 'scoped memory for tpu_custom_call.1']
    %7 = vsyncpa [#allocation3], 0
    %s8 = scalar_lea.sflag [#allocation3], 1
    %9 = vsyncpa %s8, 0
    loop: start=0, step=1, limit=4
    $region2: #{tpu_custom_call.1} parent=1 // loop_pre_header
      _
    $region3: #{tpu_custom_call.1} parent=1 // loop_header
      %s11 = sphi 0, %s15
      %p12 = scmp.ge.s32.totalorder %s11, 4
      %s21 = sphi 0, %s23
      %s24 = sphi 0, %s21
      %s25 = sphi 0, %s24
      %s41 = sphi 0, %s25
      %s47 = sphi 0, %s49
      %s50 = sphi 0, %s47
      %s51 = sphi 0, %s50
      %s67 = sphi 0, %s51
      %s73 = sphi 0, %s75
      %s76 = sphi 0, %s73
      %s77 = sphi 0, %s76
      %s93 = sphi 0, %s77
    $region4: #{tpu_custom_call.1} parent=1 // loop_header_branch
      %14 = sbr.rel (%p12) target = $region8
    $region5: #{tpu_custom_call.1} parent=1 // loop_body
      %s16 = ssub.s32 %s11, 1
      %s17 = ssub.s32 %s11, 2
      %s18 = sadd.s32 %s11, 1
      %s19 = ssub.s32 %s11, %s18
      %p20 = scmp.eq.s32.totalorder %s19, 0
      %s22 = sadd.s32 %s21, 1
      %s23 = scalar_select %p20, %s21, %s22
      %p26 = pneg %p20
      %p27 = scmp.eq.s32.totalorder %s11, 1
      %p28 = por %p26, %p27
      %p29 = scmp.ne.s32.totalorder %s21, %s24
      %p30 = scmp.eq.s32.totalorder %s11, 0
      %p31 = por %p29, %p30
      %p32 = scmp.ne.s32.totalorder %s21, %s24
      %p33 = scmp.eq.s32.totalorder %s16, 1
      %p34 = por %p32, %p33
      %p35 = scmp.ne.s32.totalorder %s24, %s25
      %p36 = scmp.eq.s32.totalorder %s16, 0
      %p37 = por %p35, %p36
      %p38 = scmp.ne.s32.totalorder %s24, %s25
      %p39 = scmp.eq.s32.totalorder %s17, 1
      %p40 = por %p38, %p39
      %p42 = scmp.ne.s32.totalorder %s25, %s41
      %p43 = scmp.eq.s32.totalorder %s17, 0
      %p44 = por %p42, %p43
      %s45 = ssub.s32 %s11, %s18
      %p46 = scmp.eq.s32.totalorder %s45, 0
      %s48 = sadd.s32 %s47, 1
      %s49 = scalar_select %p46, %s47, %s48
      %p52 = pneg %p46
      %p53 = scmp.eq.s32.totalorder %s11, 1
      %p54 = por %p52, %p53
      %p55 = scmp.ne.s32.totalorder %s47, %s50
      %p56 = scmp.eq.s32.totalorder %s11, 0
      %p57 = por %p55, %p56
      %p58 = scmp.ne.s32.totalorder %s47, %s50
      %p59 = scmp.eq.s32.totalorder %s16, 1
      %p60 = por %p58, %p59
      %p61 = scmp.ne.s32.totalorder %s50, %s51
      %p62 = scmp.eq.s32.totalorder %s16, 0
      %p63 = por %p61, %p62
      %p64 = scmp.ne.s32.totalorder %s50, %s51
      %p65 = scmp.eq.s32.totalorder %s17, 1
      %p66 = por %p64, %p65
      %p68 = scmp.ne.s32.totalorder %s51, %s67
      %p69 = scmp.eq.s32.totalorder %s17, 0
      %p70 = por %p68, %p69
      %s71 = ssub.s32 %s11, %s18
      %p72 = scmp.eq.s32.totalorder %s71, 0
      %s74 = sadd.s32 %s73, 1
      %s75 = scalar_select %p72, %s73, %s74
      %p78 = pneg %p72
      %p79 = scmp.eq.s32.totalorder %s11, 1
      %p80 = por %p78, %p79
      %p81 = scmp.ne.s32.totalorder %s73, %s76
      %p82 = scmp.eq.s32.totalorder %s11, 0
      %p83 = por %p81, %p82
      %p84 = scmp.ne.s32.totalorder %s73, %s76
      %p85 = scmp.eq.s32.totalorder %s16, 1
      %p86 = por %p84, %p85
      %p87 = scmp.ne.s32.totalorder %s76, %s77
      %p88 = scmp.eq.s32.totalorder %s16, 0
      %p89 = por %p87, %p88
      %p90 = scmp.ne.s32.totalorder %s76, %s77
      %p91 = scmp.eq.s32.totalorder %s17, 1
      %p92 = por %p90, %p91
      %p94 = scmp.ne.s32.totalorder %s77, %s93
      %p95 = scmp.eq.s32.totalorder %s17, 0
      %p96 = por %p94, %p95
      %p97 = scmp.le.s32.totalorder 1, %s11
      %p98 = scmp.lt.s32.totalorder %s11, 3
      %p99 = pnand %p97, %p98
      %p100 = pneg %p99
      // Predicated region
      $region9: #{tpu_custom_call.1} parent=5 // pred_check
        _
      $region10: #{tpu_custom_call.1} parent=5 // pred_check_branch
        %102 = sbr.rel (%p99) target = $region12
      $region11: #{tpu_custom_call.1} parent=5 // pred_region
        %s103 = ssub.s32 %s11, 1
      $region12: #{tpu_custom_call.1} parent=5 // pred_fallthru
        _
      %p104 = scmp.lt.s32.totalorder %s11, 2
      // Predicated region
      $region13: #{tpu_custom_call.1} parent=5 // pred_check
        %p105 = pneg %p104
      $region14: #{tpu_custom_call.1} parent=5 // pred_check_branch
        %107 = sbr.rel (%p105) target = $region16
      $region15: #{tpu_custom_call.1} parent=5 // pred_region
        // Predicated region
        $region17: #{tpu_custom_call.1} parent=15 // pred_check
          %p108 = pneg %p31
        $region18: #{tpu_custom_call.1} parent=15 // pred_check_branch
          %110 = sbr.rel (%p108) target = $region20
        $region19: #{tpu_custom_call.1} parent=15 // pred_region
          %s111 = sand.u32 %s21, 1
          %s112 = scalar_lea.sflag [#allocation3], %s111
          %s113 = sand.u32 %s21, 1
          %s114 = smul.addr %s113, 64
          %s115 = scalar_lea.vmem [#allocation2], %s114
          %s116 = smul.u32 2, %s11
          %s118 = ssub.s32 1024, 1024
          %119 = vsyncadd %s112, %s118
          %s120 = smul.addr %s116, 4
          %s121 = smul.addr %s120, 128
          %s122 = scalar_lea.hbm %s0, %s121
          %s123 = sshll.u32 %s115, 4
          %s124 = int_to_ptr.vmem [resolvable:$true] %s123
          %129 = dma.hbm_to_vmem [thread:$0]  %s122, 1024, %s124, %s112, 512, 512, 32
        $region20: #{tpu_custom_call.1} parent=15 // pred_fallthru
          _
        // Predicated region
        $region21: #{tpu_custom_call.1} parent=15 // pred_check
          %p130 = pneg %p57
        $region22: #{tpu_custom_call.1} parent=15 // pred_check_branch
          %132 = sbr.rel (%p130) target = $region24
        $region23: #{tpu_custom_call.1} parent=15 // pred_region
          %s133 = smul.u32 2, %s11
          %p134 = scmp.lt.s32.totalorder %s133, 3
          %s135 = scalar_select %p134, %s133, 3
          %s136 = smul.addr %s135, 8
          %s137 = scalar_lea.vmem %s1, %s136
          %s138 = smul.u32 2, %s11
        $region24: #{tpu_custom_call.1} parent=15 // pred_fallthru
          _
      $region16: #{tpu_custom_call.1} parent=5 // pred_fallthru
        _
      %p139 = scmp.le.s32.totalorder 1, %s11
      %p140 = scmp.lt.s32.totalorder %s11, 3
      %p141 = pnand %p139, %p140
      %p142 = pneg %p141
      // Predicated region
      $region25: #{tpu_custom_call.1} parent=5 // pred_check
        _
      $region26: #{tpu_custom_call.1} parent=5 // pred_check_branch
        %144 = sbr.rel (%p141) target = $region28
      $region27: #{tpu_custom_call.1} parent=5 // pred_region
        %s145 = ssub.s32 %s11, 1
        %s146 = sand.u32 %s24, 1
        %s147 = scalar_lea.sflag [#allocation3], %s146
        %s148 = sand.u32 %s24, 1
        %s149 = smul.addr %s148, 64
        %s150 = scalar_lea.vmem [#allocation2], %s149
        // Predicated region
        $region29: #{tpu_custom_call.1} parent=27 // pred_check
          %p151 = pneg %p37
        $region30: #{tpu_custom_call.1} parent=27 // pred_check_branch
          %153 = sbr.rel (%p151) target = $region32
        $region31: #{tpu_custom_call.1} parent=27 // pred_region
          %154 = dma.done %s147, 1024
        $region32: #{tpu_custom_call.1} parent=27 // pred_fallthru
          _
        %s155 = sand.u32 %s24, 1
        %s156 = scalar_lea.sflag [#allocation3], %s155
        %s157 = sand.u32 %s24, 1
        %s158 = smul.addr %s157, 64
        %s159 = scalar_lea.vmem [#allocation2], %s158
        %p160 = pneg %p37
        %p161 = pneg %p34
        %s162 = smul.u32 2, %s16
        %p163 = scmp.lt.s32.totalorder %s162, 3
        %s164 = scalar_select %p163, %s162, 3
        %s165 = smul.addr %s164, 8
        %s166 = scalar_lea.vmem %s1, %s165
        %p167 = pneg %p63
        %p168 = pneg %p60
        %p169 = pneg %p89
        %p170 = pneg %p86
        %s171 = smul.u32 2, %s16
        %p172 = scmp.lt.s32.totalorder %s171, 3
        %s173 = scalar_select %p172, %s171, 3
        %s174 = smul.addr %s173, 8
        %s175 = scalar_lea.vmem %s2, %s174
        %s176 = smul.u32 2, %s16
        %s177 = smul.u32 2, %s16
        %p178 = scmp.lt.s32.totalorder %s177, 3
        %s179 = scalar_select %p178, %s177, 3
        %s180 = smul.addr %s179, 8
        %s181 = scalar_lea.vmem %s1, %s180
        %s182 = smul.u32 2, %s16
        %s183 = smul.u32 2, %s16
        %p184 = scmp.lt.s32.totalorder %s183, 3
        %s185 = scalar_select %p184, %s183, 3
        %s186 = smul.addr %s185, 8
        %s187 = scalar_lea.vmem %s2, %s186
        %s188 = smul.u32 2, %s16
        %v189 = vld [vmem:[%s150] sm:$0xff]
        %v190 = vld [vmem:[%s150 + $0x8] sm:$0xff]
        %v191 = vld [vmem:[%s150 + $0x10] sm:$0xff]
        %v192 = vld [vmem:[%s150 + $0x18] sm:$0xff]
        %v193 = vld [vmem:[%s150 + $0x20] sm:$0xff]
        %v194 = vld [vmem:[%s150 + $0x28] sm:$0xff]
        %v195 = vld [vmem:[%s150 + $0x30] sm:$0xff]
        %v196 = vld [vmem:[%s150 + $0x38] sm:$0xff]
        %s197 = smul.u32 %s16, 16
        %v198 = vlaneseq
        %v199 = vshrl.u32 %v198, 7
        %v200 = vadd.s32 %v199, 8
        %v201 = vstv %s197
        %v202 = vadd.s32 %v201, %v199
        %v203 = vadd.s32 %v201, %v200
        %vm204 = vcmp.lt.s32.totalorder %v202, 32
        %vm205 = vcmp.lt.s32.totalorder %v203, 32
        %v206 = vmax.f32 %v189, %v191
        %v207 = vmax.f32 %v190, %v192
        %v208 = vmax.f32 %v206, %v207
        %209 = vmax.xlane.f32.xlu0 %v208
        %v210 = vpop.xlane.xlu0 %209
        %v211 = vmax.f32 %v193, %v195
        %v212 = vmax.f32 %v194, %v196
        %v213 = vmax.f32 %v211, %v212
        %214 = vmax.xlane.f32.xlu0 %v213
        %v215 = vpop.xlane.xlu0 %214
        %v216 = vlaneseq
        %v217 = vand.u32 %v216, 127
        %v218 = vadd.s32 %v217, 128
        %v219 = vadd.s32 %v217, 256
        %v220 = vadd.s32 %v217, 384
        %v221 = vld [vmem:[%s181] sm:$0xff]
        %v222 = vld [vmem:[%s181 + $0x8] sm:$0xff]
        %223 = vset.pattern.permute.xlu0 0
        %224 = vperm.xlu0 %223, %v221
        %v225 = vpop.permute.xlu0 %224
        %226 = vset.pattern.permute.xlu0 0
        %227 = vperm.xlu0 %226, %v222
        %v228 = vpop.permute.xlu0 %227
        %vm229 = vcmp.eq.s32.totalorder %v217, %v225
        %vm230 = vcmp.eq.s32.totalorder %v218, %v225
        %vm231 = vcmp.eq.s32.totalorder %v219, %v225
        %vm232 = vcmp.eq.s32.totalorder %v220, %v225
        %vm233 = vcmp.eq.s32.totalorder %v217, %v228
        %vm234 = vcmp.eq.s32.totalorder %v218, %v228
        %vm235 = vcmp.eq.s32.totalorder %v219, %v228
        %vm236 = vcmp.eq.s32.totalorder %v220, %v228
        %v237 = vsel %vm229, %v189, 0.0
        %v238 = vsel %vm230, %v190, 0.0
        %v239 = vsel %vm231, %v191, 0.0
        %v240 = vsel %vm232, %v192, 0.0
        %v241 = vsel %vm233, %v193, 0.0
        %v242 = vsel %vm234, %v194, 0.0
        %v243 = vsel %vm235, %v195, 0.0
        %v244 = vsel %vm236, %v196, 0.0
        %v245 = vadd.f32 %v237, %v238
        %v246 = vadd.f32 %v245, %v239
        %v247 = vadd.f32 %v246, %v240
        %248 = vadd.xlane.f32.xlu0 %v247
        %v249 = vpop.xlane.xlu0 %248
        %v250 = vadd.f32 %v241, %v242
        %v251 = vadd.f32 %v250, %v243
        %v252 = vadd.f32 %v251, %v244
        %253 = vadd.xlane.f32.xlu0 %v252
        %v254 = vpop.xlane.xlu0 %253
        %v255 = vsub.f32 %v189, %v210
        %v256 = vsub.f32 %v190, %v210
        %v257 = vsub.f32 %v191, %v210
        %v258 = vsub.f32 %v192, %v210
        %v259 = vsub.f32 %v193, %v215
        %v260 = vsub.f32 %v194, %v215
        %v261 = vsub.f32 %v195, %v215
        %v262 = vsub.f32 %v196, %v215
        %v263 = vmul.f32 %v255, 1.442695
        %v264 = vpow.pop %v263
        %v265 = vmul.f32 %v256, 1.442695
        %v266 = vpow.pop %v265
        %v267 = vmul.f32 %v257, 1.442695
        %v268 = vpow.pop %v267
        %v269 = vmul.f32 %v258, 1.442695
        %v270 = vpow.pop %v269
        %v271 = vmul.f32 %v259, 1.442695
        %v272 = vpow.pop %v271
        %v273 = vmul.f32 %v260, 1.442695
        %v274 = vpow.pop %v273
        %v275 = vmul.f32 %v261, 1.442695
        %v276 = vpow.pop %v275
        %v277 = vmul.f32 %v262, 1.442695
        %v278 = vpow.pop %v277
        %v279 = vadd.f32 %v264, %v266
        %v280 = vadd.f32 %v279, %v268
        %v281 = vadd.f32 %v280, %v270
        %282 = vadd.xlane.f32.xlu0 %v281
        %v283 = vpop.xlane.xlu0 %282
        %v284 = vadd.f32 %v272, %v274
        %v285 = vadd.f32 %v284, %v276
        %v286 = vadd.f32 %v285, %v278
        %287 = vadd.xlane.f32.xlu0 %v286
        %v288 = vpop.xlane.xlu0 %287
        %v289 = vlog2.pop %v283
        %v290 = vmul.f32 %v289, 0.6931472
        %v291 = vlog2.pop %v288
        %v292 = vmul.f32 %v291, 0.6931472
        %v293 = vadd.f32 %v255, %v256
        %v294 = vadd.f32 %v293, %v257
        %v295 = vadd.f32 %v294, %v258
        %296 = vadd.xlane.f32.xlu0 %v295
        %v297 = vpop.xlane.xlu0 %296
        %v298 = vadd.f32 %v259, %v260
        %v299 = vadd.f32 %v298, %v261
        %v300 = vadd.f32 %v299, %v262
        %301 = vadd.xlane.f32.xlu0 %v300
        %v302 = vpop.xlane.xlu0 %301
        %v303 = vsub.f32 %v249, %v210
        %v304 = vsub.f32 %v254, %v215
        %v305 = vmul.f32 %v303, 0.9
        %v306 = vmul.f32 %v304, 0.9
        %v307 = vsub.f32 %v290, %v305
        %v308 = vsub.f32 %v292, %v306
        %v309 = vmul.f32 %v297, 0.0001953125
        %v310 = vmul.f32 %v302, 0.0001953125
        %v311 = vsub.f32 %v307, %v309
        %v312 = vsub.f32 %v308, %v310
        %v313 = vsel %vm204, %v311, 0.0
        %v314 = vsel %vm205, %v312, 0.0
        %vm315 = vcmask 7168
        %316 = vst.msk [vmem:[%s187] sm:$0xff] %vm315, %v313
        %317 = vst.msk [vmem:[%s187 + $0x8] sm:$0xff] %vm315, %v314
        %s318 = smul.u32 2, %s16
        %p319 = scmp.lt.s32.totalorder %s318, 3
        %s320 = scalar_select %p319, %s318, 3
        %s321 = smul.addr %s320, 8
        %s322 = scalar_lea.vmem %s2, %s321
        // Predicated region
        $region33: #{tpu_custom_call.1} parent=27 // pred_check
          %p323 = pneg %p86
        $region34: #{tpu_custom_call.1} parent=27 // pred_check_branch
          %325 = sbr.rel (%p323) target = $region36
        $region35: #{tpu_custom_call.1} parent=27 // pred_region
          %s326 = smul.u32 2, %s16
        $region36: #{tpu_custom_call.1} parent=27 // pred_fallthru
          _
      $region28: #{tpu_custom_call.1} parent=5 // pred_fallthru
        _
      %p327 = scmp.le.s32.totalorder 2, %s11
      // Predicated region
      $region37: #{tpu_custom_call.1} parent=5 // pred_check
        %p328 = pneg %p327
      $region38: #{tpu_custom_call.1} parent=5 // pred_check_branch
        %330 = sbr.rel (%p328) target = $region40
      $region39: #{tpu_custom_call.1} parent=5 // pred_region
        %s331 = ssub.s32 %s11, 2
        // Predicated region
        $region41: #{tpu_custom_call.1} parent=39 // pred_check
          %p332 = pneg %p92
        $region42: #{tpu_custom_call.1} parent=39 // pred_check_branch
          %334 = sbr.rel (%p332) target = $region44
        $region43: #{tpu_custom_call.1} parent=39 // pred_region
          %s335 = smul.u32 2, %s17
          %p336 = scmp.lt.s32.totalorder %s335, 3
          %s337 = scalar_select %p336, %s335, 3
          %s338 = smul.addr %s337, 8
          %s339 = scalar_lea.vmem %s2, %s338
        $region44: #{tpu_custom_call.1} parent=39 // pred_fallthru
          _
      $region40: #{tpu_custom_call.1} parent=5 // pred_fallthru
        _
    $region6: #{tpu_custom_call.1} parent=1 // loop_footer
      %s15 = sadd.s32 1, %s11
    $region7: #{tpu_custom_call.1} parent=1 // loop_footer_branch
      %10 = sbr.rel target = $region3
    $region8: #{tpu_custom_call.1} parent=1 // loop_exit
      _
    %340 = vsyncpa [#allocation3], 1
    %s341 = scalar_lea.sflag [#allocation3], 1
    %342 = vsyncpa %s341, 1

</llo_original>
